<compile_context>
chip_gen: v7x
topology: tpu7x:2x2x1
jax: 0.10.0
libtpu: 0.0.40
codegen_flags: <defaults>
</compile_context>

<pallas_src>
import functools

import jax
import jax.numpy as jnp
import numpy as np
from jax.experimental import pallas as pl
from jax.experimental.pallas import tpu as pltpu


def _round_up(n, m):
    return ((n + m - 1) // m) * m


# --------------------------------------------------------------------------
# Parameter slab packing (one DMA for all weights + biases).
#
#   rows      lanes    contents
#   [ 0:32 ,  0:32 ]   W2 (32,32)          torch layout (out, in)
#   [32:64 ,  0:32 ]   W3 (32,32)
#   [64:96 ,  0:2  ]   W1 * 0.1 (32,2)     x/10 scale folded in
#   [64:96 ,  2    ]   b1 (32,)
#   [64:96 ,  3    ]   b2 (32,)
#   [64:96 ,  4    ]   b3 (32,)
#   [96:104,  0:32 ]   W4 (3,32), zero-padded to 8 sublane rows
#   [96:104,  32   ]   b4 (3,),  zero-padded
# --------------------------------------------------------------------------
_SLAB_ROWS = 104
_SLAB_COLS = 128


def pack_params(params):
    slab = jnp.zeros((_SLAB_ROWS, _SLAB_COLS), jnp.float32)
    slab = slab.at[0:32, 0:32].set(params["w2"].astype(jnp.float32))
    slab = slab.at[32:64, 0:32].set(params["w3"].astype(jnp.float32))
    # Fold the x/10 input scale into W1 (note: x*(W1*0.1) vs (x/10)*W1 can
    # differ by ~1 ulp; well within 1e-5 tolerance).
    slab = slab.at[64:96, 0:2].set(params["w1"].astype(jnp.float32) * jnp.float32(0.1))
    slab = slab.at[64:96, 2].set(params["b1"].astype(jnp.float32))
    slab = slab.at[64:96, 3].set(params["b2"].astype(jnp.float32))
    slab = slab.at[64:96, 4].set(params["b3"].astype(jnp.float32))
    slab = slab.at[96:99, 0:32].set(params["w4"].astype(jnp.float32))
    slab = slab.at[96:99, 32].set(params["b4"].astype(jnp.float32))
    return slab


# --------------------------------------------------------------------------
# Kernel: one lane tile of TB batch columns, feature-major.
#   xT_ref: (2, TB)   p_ref: (104, 128) resident slab   oT_ref: (3, TB)
# --------------------------------------------------------------------------
def _mlp_kernel(xT_ref, p_ref, oT_ref):
    xT = xT_ref[...]                                  # (2, TB), lane-dense

    # ---- Layer 1 on the VPU: a K=2 MXU matmul would waste a fill/drain.
    w1c0 = p_ref[64:96, 0:1]                          # (32, 1), scale pre-folded
    w1c1 = p_ref[64:96, 1:2]
    b1 = p_ref[64:96, 2:3]
    h = w1c0 * xT[0:1, :] + w1c1 * xT[1:2, :] + b1    # (32, TB)
    h = jnp.maximum(h, 0.0)

    # ---- Layer 2 (MXU): (32,32) @ (32,TB)
    h = jnp.dot(p_ref[0:32, 0:32], h, preferred_element_type=jnp.float32)
    h = jnp.maximum(h + p_ref[64:96, 3:4], 0.0)

    # ---- Layer 3 (MXU)
    h = jnp.dot(p_ref[32:64, 0:32], h, preferred_element_type=jnp.float32)
    h = jnp.maximum(h + p_ref[64:96, 4:5], 0.0)

    # ---- Layer 4 (MXU), W4 zero-padded to 8 sublanes; keep first 3 rows.
    y = jnp.dot(p_ref[96:104, 0:32], h, preferred_element_type=jnp.float32)
    y = y + p_ref[96:104, 32:33]
    oT_ref[...] = y[0:3, :].astype(oT_ref.dtype)


# --------------------------------------------------------------------------
# Wrapper: pad batch to a multiple of the lane tile, transpose to
# feature-major, run the pipelined kernel, transpose back.
# --------------------------------------------------------------------------
@functools.partial(jax.jit, static_argnames=("tb",))
def mlp_param_model_forward(x, slab, *, tb=512):
    """x: (B, 2) float32, slab: packed params.  Returns (B, 3) float32."""
    B = x.shape[0]
    TB = min(tb, _round_up(B, 128))          # lane tile (multiple of 128)
    B_pad = _round_up(B, TB)
    num_tiles = B_pad // TB

    xT = jnp.zeros((2, B_pad), jnp.float32).at[:, :B].set(
        jnp.asarray(x, jnp.float32).T)

    yT = pl.pallas_call(
        _mlp_kernel,
        out_shape=jax.ShapeDtypeStruct((3, B_pad), jnp.float32),
        grid=(num_tiles,),
        in_specs=[
            pl.BlockSpec((2, TB), lambda i: (0, i)),
            # Constant index_map -> slab DMA'd once, stays VMEM-resident.
            pl.BlockSpec((_SLAB_ROWS, _SLAB_COLS), lambda i: (0, 0)),
        ],
        out_specs=pl.BlockSpec((3, TB), lambda i: (0, i)),
        compiler_params=pltpu.CompilerParams(
            dimension_semantics=("parallel",)),   # 2x TCs on v7x; no-op v5e/v6e
    )(xT, slab)

    return yT[:, :B].T


# --------------------------------------------------------------------------
# Deterministic init in torch nn.Linear layout: W (out,in), b (out,)
# --------------------------------------------------------------------------
def init_params():
    key = jax.random.PRNGKey(0)
    dims = [(2, 32), (32, 32), (32, 32), (32, 3)]
    params = {}
    for i, (fan_in, fan_out) in enumerate(dims, start=1):
        key, kw, kb = jax.random.split(key, 3)
        bound = 1.0 / np.sqrt(fan_in)
        params[f"w{i}"] = jax.random.uniform(
            kw, (fan_out, fan_in), jnp.float32, -bound, bound)
        params[f"b{i}"] = jax.random.uniform(
            kb, (fan_out,), jnp.float32, -bound, bound)
    return params


def _reference(x, params):
    """Plain-JAX reference mirroring the PyTorch forward exactly."""
    h = x / 10.0
    h = jnp.maximum(h @ params["w1"].T + params["b1"], 0.0)
    h = jnp.maximum(h @ params["w2"].T + params["b2"], 0.0)
    h = jnp.maximum(h @ params["w3"].T + params["b3"], 0.0)
    return h @ params["w4"].T + params["b4"]


if __name__ == "__main__":
    params = init_params()
    slab = pack_params(params)

    # Small, module-consistent input: batch of 2D nominal positions.
    B = 8
    x = jax.random.normal(jax.random.PRNGKey(0), (B, 2), jnp.float32) * 5.0

    y = jax.block_until_ready(mlp_param_model_forward(x, slab))
    np.testing.assert_allclose(np.asarray(y), np.asarray(_reference(x, params)),
                               rtol=1e-5, atol=1e-5)
    assert y.shape == (B, 3)

    # Exercise the multi-tile / padded batch path as well.
    B2 = 1500
    x2 = jax.random.normal(jax.random.PRNGKey(1), (B2, 2), jnp.float32) * 5.0
    y2 = jax.block_until_ready(mlp_param_model_forward(x2, slab))
    np.testing.assert_allclose(np.asarray(y2), np.asarray(_reference(x2, params)),
                               rtol=1e-5, atol=1e-5)
    assert y2.shape == (B2, 3)

    print("KERNEL_OK")
</pallas_src>

<mosaic_0001>
module attributes {stable_mosaic.version = 11 : i64} {
  func.func @_mlp_kernel(%arg0: i32, %arg1: memref<2x128xf32, #tpu.memory_space<vmem>>, %arg2: memref<104x128xf32, #tpu.memory_space<vmem>>, %arg3: memref<3x128xf32, #tpu.memory_space<vmem>>) attributes {dimension_semantics = [#tpu.dimension_semantics<parallel>], iteration_bounds = array<i64: 1>, scalar_prefetch = 0 : i64, scratch_operands = 0 : i64, tpu.core_type = #tpu.core_type<tc>, window_params = [{transform_indices = @transform_0, window_bounds = array<i64: 2, 128>}, {pipeline_mode = #tpu.pipeline_mode<synchronous>, transform_indices = @transform_1, window_bounds = array<i64: 104, 128>}, {transform_indices = @transform_2, window_bounds = array<i64: 3, 128>}]} {
    %c0 = arith.constant 0 : index
    %c0_0 = arith.constant 0 : index
    %0 = vector.load %arg1[%c0, %c0_0] : memref<2x128xf32, #tpu.memory_space<vmem>>, vector<2x128xf32>
    %c64 = arith.constant 64 : index
    %c0_1 = arith.constant 0 : index
    %1 = vector.load %arg2[%c64, %c0_1] : memref<104x128xf32, #tpu.memory_space<vmem>>, vector<32x1xf32>
    %c64_2 = arith.constant 64 : index
    %c1 = arith.constant 1 : index
    %2 = vector.load %arg2[%c64_2, %c1] : memref<104x128xf32, #tpu.memory_space<vmem>>, vector<32x1xf32>
    %c64_3 = arith.constant 64 : index
    %c2 = arith.constant 2 : index
    %3 = vector.load %arg2[%c64_3, %c2] : memref<104x128xf32, #tpu.memory_space<vmem>>, vector<32x1xf32>
    %4 = vector.extract_strided_slice %0 {offsets = [0, 0], sizes = [1, 128], strides = [1, 1]} : vector<2x128xf32> to vector<1x128xf32>
    %5 = vector.broadcast %1 : vector<32x1xf32> to vector<32x128xf32>
    %6 = vector.broadcast %4 : vector<1x128xf32> to vector<32x128xf32>
    %7 = arith.mulf %5, %6 : vector<32x128xf32>
    %8 = vector.extract_strided_slice %0 {offsets = [1, 0], sizes = [1, 128], strides = [1, 1]} : vector<2x128xf32> to vector<1x128xf32>
    %9 = vector.broadcast %2 : vector<32x1xf32> to vector<32x128xf32>
    %10 = vector.broadcast %8 : vector<1x128xf32> to vector<32x128xf32>
    %11 = arith.mulf %9, %10 : vector<32x128xf32>
    %12 = arith.addf %7, %11 : vector<32x128xf32>
    %13 = vector.broadcast %3 : vector<32x1xf32> to vector<32x128xf32>
    %14 = arith.addf %12, %13 : vector<32x128xf32>
    %cst = arith.constant 0.000000e+00 : f32
    %15 = vector.broadcast %cst : f32 to vector<32x128xf32>
    %16 = arith.maximumf %14, %15 : vector<32x128xf32>
    %c0_4 = arith.constant 0 : index
    %c0_5 = arith.constant 0 : index
    %17 = vector.load %arg2[%c0_4, %c0_5] : memref<104x128xf32, #tpu.memory_space<vmem>>, vector<32x32xf32>
    %cst_6 = arith.constant dense<0.000000e+00> : vector<32x128xf32>
    %18 = tpu.matmul %17, %16, %cst_6 {dimension_numbers = #tpu.dot_dimension_numbers<[1], [0], [0], [1], [0, 0, 1, 1], [], []>} : vector<32x32xf32>, vector<32x128xf32>, vector<32x128xf32> -> vector<32x128xf32>
    %c64_7 = arith.constant 64 : index
    %c3 = arith.constant 3 : index
    %19 = vector.load %arg2[%c64_7, %c3] : memref<104x128xf32, #tpu.memory_space<vmem>>, vector<32x1xf32>
    %20 = vector.broadcast %19 : vector<32x1xf32> to vector<32x128xf32>
    %21 = arith.addf %18, %20 : vector<32x128xf32>
    %cst_8 = arith.constant 0.000000e+00 : f32
    %22 = vector.broadcast %cst_8 : f32 to vector<32x128xf32>
    %23 = arith.maximumf %21, %22 : vector<32x128xf32>
    %c32 = arith.constant 32 : index
    %c0_9 = arith.constant 0 : index
    %24 = vector.load %arg2[%c32, %c0_9] : memref<104x128xf32, #tpu.memory_space<vmem>>, vector<32x32xf32>
    %cst_10 = arith.constant dense<0.000000e+00> : vector<32x128xf32>
    %25 = tpu.matmul %24, %23, %cst_10 {dimension_numbers = #tpu.dot_dimension_numbers<[1], [0], [0], [1], [0, 0, 1, 1], [], []>} : vector<32x32xf32>, vector<32x128xf32>, vector<32x128xf32> -> vector<32x128xf32>
    %c64_11 = arith.constant 64 : index
    %c4 = arith.constant 4 : index
    %26 = vector.load %arg2[%c64_11, %c4] : memref<104x128xf32, #tpu.memory_space<vmem>>, vector<32x1xf32>
    %27 = vector.broadcast %26 : vector<32x1xf32> to vector<32x128xf32>
    %28 = arith.addf %25, %27 : vector<32x128xf32>
    %cst_12 = arith.constant 0.000000e+00 : f32
    %29 = vector.broadcast %cst_12 : f32 to vector<32x128xf32>
    %30 = arith.maximumf %28, %29 : vector<32x128xf32>
    %c96 = arith.constant 96 : index
    %c0_13 = arith.constant 0 : index
    %31 = vector.load %arg2[%c96, %c0_13] : memref<104x128xf32, #tpu.memory_space<vmem>>, vector<8x32xf32>
    %cst_14 = arith.constant dense<0.000000e+00> : vector<8x128xf32>
    %32 = tpu.matmul %31, %30, %cst_14 {dimension_numbers = #tpu.dot_dimension_numbers<[1], [0], [0], [1], [0, 0, 1, 1], [], []>} : vector<8x32xf32>, vector<32x128xf32>, vector<8x128xf32> -> vector<8x128xf32>
    %c96_15 = arith.constant 96 : index
    %c32_16 = arith.constant 32 : index
    %33 = vector.load %arg2[%c96_15, %c32_16] : memref<104x128xf32, #tpu.memory_space<vmem>>, vector<8x1xf32>
    %34 = vector.broadcast %33 : vector<8x1xf32> to vector<8x128xf32>
    %35 = arith.addf %32, %34 : vector<8x128xf32>
    %36 = vector.extract_strided_slice %35 {offsets = [0, 0], sizes = [3, 128], strides = [1, 1]} : vector<8x128xf32> to vector<3x128xf32>
    %c0_17 = arith.constant 0 : index
    %c0_18 = arith.constant 0 : index
    %37 = vector.load %arg3[%c0_17, %c0_18] : memref<3x128xf32, #tpu.memory_space<vmem>>, vector<3x128xf32>
    tpu.vector_store %arg3[%c0_17, %c0_18], %36 {strides = array<i32>} : memref<3x128xf32, #tpu.memory_space<vmem>>, vector<3x128xf32>,
    return
  }
  func.func @transform_0(%arg0: i32) -> (i32, i32) {
    %c0_i32 = arith.constant 0 : i32
    %c0_i32_0 = arith.constant 0 : i32
    return %c0_i32, %arg0 : i32, i32
  }
  func.func @transform_1(%arg0: i32) -> (i32, i32) {
    %c0_i32 = arith.constant 0 : i32
    %c0_i32_0 = arith.constant 0 : i32
    %c0_i32_1 = arith.constant 0 : i32
    return %c0_i32, %c0_i32_0 : i32, i32
  }
  func.func @transform_2(%arg0: i32) -> (i32, i32) {
    %c0_i32 = arith.constant 0 : i32
    %c0_i32_0 = arith.constant 0 : i32
    return %c0_i32, %arg0 : i32, i32
  }
}

</mosaic_0001>

<llo_original>
// kernel: mlp_param_model_forward.1
$region0: #{mlp_param_model_forward.1}
  #allocation0 [shape = 'u32[]', space=smem, size = 0x4, offset = 0x4, fixed_abs, tag = 'smem constant byte address 0x4 - core index']
  #allocation1 [shape = 'u32[144,128]{1,0:T(1,128)}', space=vmem, size = 0x12000, scoped, tag = 'internal scratch']
  %s0 = inlined_call_operand.vmem [shape: f32[2,128], index: 0, kind: input, shape index: {}]
  %s1 = inlined_call_operand.hbm [shape: f32[104,128], index: 1, kind: input, shape index: {}]
  %s2 = inlined_call_operand.vmem [shape: f32[3,128], index: 2, kind: output, shape index: {}]
  %s3 = sld [smem:[#allocation0]]
  $region22: #{mlp_param_model_forward.1} parent=0
    _
  %s5 = ssub.s32 1, %s3
  %s6 = scalar_select 0, %s5, %s3
  $region1: #{mlp_param_model_forward.1} parent=0
    #allocation2 [shape = 'u8[53248]{0}', space=vmem, size = 0xd000, scoped, tag = 'input window, operand 1, single buffered']
    #allocation3 [shape = 's32[1]{0}', space=sflag, size = 0x4, scoped, tag = 'scoped memory for mlp_param_model_forward.1']
    %7 = vsyncpa [#allocation3], 0
    // Predicated region
    $region2: #{mlp_param_model_forward.1} parent=1 // pred_check
      _
    $region3: #{mlp_param_model_forward.1} parent=1 // pred_check_branch
      %9 = sbr.rel (0) target = $region5
    $region4: #{mlp_param_model_forward.1} parent=1 // pred_region
      _
    $region5: #{mlp_param_model_forward.1} parent=1 // pred_fallthru
      _
    // Predicated region
    $region6: #{mlp_param_model_forward.1} parent=1 // pred_check
      _
    $region7: #{mlp_param_model_forward.1} parent=1 // pred_check_branch
      %11 = sbr.rel (0) target = $region9
    $region8: #{mlp_param_model_forward.1} parent=1 // pred_region
      %s13 = ssub.s32 1664, 1664
      %14 = vsyncadd [#allocation3], %s13
      %s15 = sshll.u32 [#allocation2], 4
      %s16 = int_to_ptr.vmem [resolvable:$true] %s15
      %21 = dma.hbm_to_vmem [thread:$0]  %s1, 1664, %s16, [#allocation3], 128, 128, 8
    $region9: #{mlp_param_model_forward.1} parent=1 // pred_fallthru
      _
    // Predicated region
    $region10: #{mlp_param_model_forward.1} parent=1 // pred_check
      _
    $region11: #{mlp_param_model_forward.1} parent=1 // pred_check_branch
      %23 = sbr.rel (0) target = $region13
    $region12: #{mlp_param_model_forward.1} parent=1 // pred_region
      %24 = dma.done [#allocation3], 1664
    $region13: #{mlp_param_model_forward.1} parent=1 // pred_fallthru
      _
    %v25 = vld [vmem:[%s0] sm:$0x3]
    %v26 = vld [vmem:[#allocation2 + $0x40] sm:$0xff]
    %v27 = vld [vmem:[#allocation2 + $0x48] sm:$0xff]
    %v28 = vld [vmem:[#allocation2 + $0x50] sm:$0xff]
    %v29 = vld [vmem:[#allocation2 + $0x58] sm:$0xff]
    %31 = vset.pattern.permute.xlu0 0
    %32 = vperm.xlu0 %31, %v26
    %v33 = vpop.permute.xlu0 %32
    %36 = vset.pattern.permute.xlu0 0
    %37 = vperm.xlu0 %36, %v27
    %v38 = vpop.permute.xlu0 %37
    %41 = vset.pattern.permute.xlu0 0
    %42 = vperm.xlu0 %41, %v28
    %v43 = vpop.permute.xlu0 %42
    %46 = vset.pattern.permute.xlu0 0
    %47 = vperm.xlu0 %46, %v29
    %v48 = vpop.permute.xlu0 %47
    %v50 = vlaneseq
    %v51 = vshrl.u32 %v50, 7
    %v52 = vsub.s32 0, %v51
    %v53 = vrot.slane %v25, %v52
    %v54 = vmul.f32 %v33, %v53
    %v55 = vmul.f32 %v38, %v53
    %v56 = vmul.f32 %v43, %v53
    %v57 = vmul.f32 %v48, %v53
    %58 = vset.pattern.permute.xlu0 1
    %59 = vperm.xlu0 %58, %v26
    %v60 = vpop.permute.xlu0 %59
    %62 = vset.pattern.permute.xlu0 1
    %63 = vperm.xlu0 %62, %v27
    %v64 = vpop.permute.xlu0 %63
    %66 = vset.pattern.permute.xlu0 1
    %67 = vperm.xlu0 %66, %v28
    %v68 = vpop.permute.xlu0 %67
    %70 = vset.pattern.permute.xlu0 1
    %71 = vperm.xlu0 %70, %v29
    %v72 = vpop.permute.xlu0 %71
    %v74 = vlaneseq
    %v75 = vshrl.u32 %v74, 7
    %v76 = vsub.s32 1, %v75
    %v77 = vrot.slane %v25, %v76
    %v78 = vmul.f32 %v60, %v77
    %v79 = vmul.f32 %v64, %v77
    %v80 = vmul.f32 %v68, %v77
    %v81 = vmul.f32 %v72, %v77
    %v82 = vadd.f32 %v54, %v78
    %v83 = vadd.f32 %v55, %v79
    %v84 = vadd.f32 %v56, %v80
    %v85 = vadd.f32 %v57, %v81
    %86 = vset.pattern.permute.xlu0 2
    %87 = vperm.xlu0 %86, %v26
    %v88 = vpop.permute.xlu0 %87
    %90 = vset.pattern.permute.xlu0 2
    %91 = vperm.xlu0 %90, %v27
    %v92 = vpop.permute.xlu0 %91
    %94 = vset.pattern.permute.xlu0 2
    %95 = vperm.xlu0 %94, %v28
    %v96 = vpop.permute.xlu0 %95
    %98 = vset.pattern.permute.xlu0 2
    %99 = vperm.xlu0 %98, %v29
    %v100 = vpop.permute.xlu0 %99
    %v102 = vadd.f32 %v82, %v88
    %v103 = vadd.f32 %v83, %v92
    %v104 = vadd.f32 %v84, %v96
    %v105 = vadd.f32 %v85, %v100
    %v106 = vmax.f32 %v102, 0.0
    %v107 = vmax.f32 %v103, 0.0
    %v108 = vmax.f32 %v104, 0.0
    %v109 = vmax.f32 %v105, 0.0
    %v110 = vld [vmem:[#allocation2] sm:$0xff]
    %v111 = vld [vmem:[#allocation2 + $0x8] sm:$0xff]
    %v112 = vld [vmem:[#allocation2 + $0x10] sm:$0xff]
    %v113 = vld [vmem:[#allocation2 + $0x18] sm:$0xff]
    %114 = vset.pattern.permute.xlu0 3
    %115 = vperm.xlu0 %114, %v26
    %v116 = vpop.permute.xlu0 %115
    %118 = vset.pattern.permute.xlu0 3
    %119 = vperm.xlu0 %118, %v27
    %v120 = vpop.permute.xlu0 %119
    %122 = vset.pattern.permute.xlu0 3
    %123 = vperm.xlu0 %122, %v28
    %v124 = vpop.permute.xlu0 %123
    %126 = vset.pattern.permute.xlu0 3
    %127 = vperm.xlu0 %126, %v29
    %v128 = vpop.permute.xlu0 %127
    %vm130 = vcmask 261120
    %v132 = vsel %vm130, %v110, 0
    %v135 = vsel %vm130, %v111, 0
    %v138 = vsel %vm130, %v112, 0
    %v141 = vsel %vm130, %v113, 0
    %143 = vmatprep.subr.mxu0 0.0
    %144 = vmatpush1.msra.mxu0 %v106
    %145 = vmatprep.subr.mxu0 0.0
    %146 = vmatpush1.msra.mxu0 %v107
    %147 = vmatprep.subr.mxu0 0.0
    %148 = vmatpush1.msra.mxu0 %v108
    %149 = vmatprep.subr.mxu0 0.0
    %150 = vmatpush1.msra.mxu0 %v109
    %151 = vmatprep.subr.mxu0 0.0
    %152 = vmatpush1.msra.mxu0 0.0
    %153 = vmatprep.subr.mxu0 0.0
    %154 = vmatpush1.msra.mxu0 0.0
    %155 = vmatprep.subr.mxu0 0.0
    %156 = vmatpush1.msra.mxu0 0.0
    %157 = vmatprep.subr.mxu0 0.0
    %158 = vmatpush1.msra.mxu0 0.0
    %159 = vmatprep.subr.mxu0 0.0
    %160 = vmatpush1.msra.mxu0 0.0
    %161 = vmatprep.subr.mxu0 0.0
    %162 = vmatpush1.msra.mxu0 0.0
    %163 = vmatprep.subr.mxu0 0.0
    %164 = vmatpush1.msra.mxu0 0.0
    %165 = vmatprep.subr.mxu0 0.0
    %166 = vmatpush1.msra.mxu0 0.0
    %167 = vmatprep.subr.mxu0 0.0
    %168 = vmatpush1.msra.mxu0 0.0
    %169 = vmatprep.subr.mxu0 0.0
    %170 = vmatpush1.msra.mxu0 0.0
    %171 = vmatprep.subr.mxu0 0.0
    %172 = vmatpush1.msra.mxu0 0.0
    %173 = vmatprep.subr.mxu0 0.0
    %174 = vmatpush1.msra.mxu0 0.0
    %175 = vmatprep.subr.mxu0 0.0
    %176 = vmatpush1.msra.mxu0 0.0
    %177 = vmatprep.subr.mxu0 0.0
    %178 = vmatpush1.msra.mxu0 0.0
    %179 = vmatprep.subr.mxu0 0.0
    %180 = vmatpush1.msra.mxu0 0.0
    %181 = vmatprep.subr.mxu0 0.0
    %182 = vmatpush1.msra.mxu0 0.0
    %183 = vmatprep.subr.mxu0 0.0
    %184 = vmatpush1.msra.mxu0 0.0
    %185 = vmatprep.subr.mxu0 0.0
    %186 = vmatpush1.msra.mxu0 0.0
    %187 = vmatprep.subr.mxu0 0.0
    %188 = vmatpush1.msra.mxu0 0.0
    %189 = vmatprep.subr.mxu0 0.0
    %190 = vmatpush1.msra.mxu0 0.0
    %191 = vmatprep.subr.mxu0 0.0
    %192 = vmatpush1.msra.mxu0 0.0
    %193 = vmatprep.subr.mxu0 0.0
    %194 = vmatpush1.msra.mxu0 0.0
    %195 = vmatprep.subr.mxu0 0.0
    %196 = vmatpush1.msra.mxu0 0.0
    %197 = vmatprep.subr.mxu0 0.0
    %198 = vmatpush1.msra.mxu0 0.0
    %199 = vmatprep.subr.mxu0 0.0
    %200 = vmatpush1.msra.mxu0 0.0
    %201 = vmatprep.subr.mxu0 0.0
    %202 = vmatpush1.msra.mxu0 0.0
    %203 = vmatprep.subr.mxu0 0.0
    %204 = vmatpush1.msra.mxu0 0.0
    %205 = vmatprep.subr.mxu0 0.0
    %206 = vmatpush1.msra.mxu0 0.0
    %207 = vmatprep.mubr.f32.mxu0 0.0
    %208 = vmatmul.mubr.f32.gmra.mrb[0].mxu0 %v132
    %v209 = vpop.f32.mrb[0].mxu0
    %v210 = vadd.f32 %v116, %v209
    %v211 = vpop.f32.mrb[0].mxu0
    %212 = vmatprep.mubr.f32.mxu0 0.0
    %213 = vmatmul.mubr.f32.gmra.mrb[0].mxu0 %v135
    %v214 = vpop.f32.mrb[0].mxu0
    %v215 = vadd.f32 %v120, %v214
    %v216 = vpop.f32.mrb[0].mxu0
    %217 = vmatprep.mubr.f32.mxu0 0.0
    %218 = vmatmul.mubr.f32.gmra.mrb[0].mxu0 %v138
    %v219 = vpop.f32.mrb[0].mxu0
    %v220 = vadd.f32 %v124, %v219
    %v221 = vpop.f32.mrb[0].mxu0
    %222 = vmatprep.mubr.f32.mxu0 0.0
    %223 = vmatmul.mubr.f32.gmra.mrb[0].mxu0 %v141
    %v224 = vpop.f32.mrb[0].mxu0
    %v225 = vadd.f32 %v128, %v224
    %v226 = vpop.f32.mrb[0].mxu0
    %227 = vdwg.mxu0
    %v228 = vmax.f32 %v210, 0.0
    %v229 = vmax.f32 %v215, 0.0
    %v230 = vmax.f32 %v220, 0.0
    %v231 = vmax.f32 %v225, 0.0
    %v232 = vld [vmem:[#allocation2 + $0x20] sm:$0xff]
    %v233 = vld [vmem:[#allocation2 + $0x28] sm:$0xff]
    %v234 = vld [vmem:[#allocation2 + $0x30] sm:$0xff]
    %v235 = vld [vmem:[#allocation2 + $0x38] sm:$0xff]
    %236 = vset.pattern.permute.xlu0 4
    %237 = vperm.xlu0 %236, %v26
    %v238 = vpop.permute.xlu0 %237
    %240 = vset.pattern.permute.xlu0 4
    %241 = vperm.xlu0 %240, %v27
    %v242 = vpop.permute.xlu0 %241
    %244 = vset.pattern.permute.xlu0 4
    %245 = vperm.xlu0 %244, %v28
    %v246 = vpop.permute.xlu0 %245
    %248 = vset.pattern.permute.xlu0 4
    %249 = vperm.xlu0 %248, %v29
    %v250 = vpop.permute.xlu0 %249
    %v253 = vsel %vm130, %v232, 0
    %v256 = vsel %vm130, %v233, 0
    %v259 = vsel %vm130, %v234, 0
    %v262 = vsel %vm130, %v235, 0
    %264 = vmatprep.subr.mxu0 0.0
    %265 = vmatpush1.msra.mxu0 %v228
    %266 = vmatprep.subr.mxu0 0.0
    %267 = vmatpush1.msra.mxu0 %v229
    %268 = vmatprep.subr.mxu0 0.0
    %269 = vmatpush1.msra.mxu0 %v230
    %270 = vmatprep.subr.mxu0 0.0
    %271 = vmatpush1.msra.mxu0 %v231
    %272 = vmatprep.subr.mxu0 0.0
    %273 = vmatpush1.msra.mxu0 0.0
    %274 = vmatprep.subr.mxu0 0.0
    %275 = vmatpush1.msra.mxu0 0.0
    %276 = vmatprep.subr.mxu0 0.0
    %277 = vmatpush1.msra.mxu0 0.0
    %278 = vmatprep.subr.mxu0 0.0
    %279 = vmatpush1.msra.mxu0 0.0
    %280 = vmatprep.subr.mxu0 0.0
    %281 = vmatpush1.msra.mxu0 0.0
    %282 = vmatprep.subr.mxu0 0.0
    %283 = vmatpush1.msra.mxu0 0.0
    %284 = vmatprep.subr.mxu0 0.0
    %285 = vmatpush1.msra.mxu0 0.0
    %286 = vmatprep.subr.mxu0 0.0
    %287 = vmatpush1.msra.mxu0 0.0
    %288 = vmatprep.subr.mxu0 0.0
    %289 = vmatpush1.msra.mxu0 0.0
    %290 = vmatprep.subr.mxu0 0.0
    %291 = vmatpush1.msra.mxu0 0.0
    %292 = vmatprep.subr.mxu0 0.0
    %293 = vmatpush1.msra.mxu0 0.0
    %294 = vmatprep.subr.mxu0 0.0
    %295 = vmatpush1.msra.mxu0 0.0
    %296 = vmatprep.subr.mxu0 0.0
    %297 = vmatpush1.msra.mxu0 0.0
    %298 = vmatprep.subr.mxu0 0.0
    %299 = vmatpush1.msra.mxu0 0.0
    %300 = vmatprep.subr.mxu0 0.0
    %301 = vmatpush1.msra.mxu0 0.0
    %302 = vmatprep.subr.mxu0 0.0
    %303 = vmatpush1.msra.mxu0 0.0
    %304 = vmatprep.subr.mxu0 0.0
    %305 = vmatpush1.msra.mxu0 0.0
    %306 = vmatprep.subr.mxu0 0.0
    %307 = vmatpush1.msra.mxu0 0.0
    %308 = vmatprep.subr.mxu0 0.0
    %309 = vmatpush1.msra.mxu0 0.0
    %310 = vmatprep.subr.mxu0 0.0
    %311 = vmatpush1.msra.mxu0 0.0
    %312 = vmatprep.subr.mxu0 0.0
    %313 = vmatpush1.msra.mxu0 0.0
    %314 = vmatprep.subr.mxu0 0.0
    %315 = vmatpush1.msra.mxu0 0.0
    %316 = vmatprep.subr.mxu0 0.0
    %317 = vmatpush1.msra.mxu0 0.0
    %318 = vmatprep.subr.mxu0 0.0
    %319 = vmatpush1.msra.mxu0 0.0
    %320 = vmatprep.subr.mxu0 0.0
    %321 = vmatpush1.msra.mxu0 0.0
    %322 = vmatprep.subr.mxu0 0.0
    %323 = vmatpush1.msra.mxu0 0.0
    %324 = vmatprep.subr.mxu0 0.0
    %325 = vmatpush1.msra.mxu0 0.0
    %326 = vmatprep.subr.mxu0 0.0
    %327 = vmatpush1.msra.mxu0 0.0
    %328 = vmatprep.mubr.f32.mxu0 0.0
    %329 = vmatmul.mubr.f32.gmra.mrb[0].mxu0 %v253
    %v330 = vpop.f32.mrb[0].mxu0
    %v331 = vadd.f32 %v238, %v330
    %v332 = vpop.f32.mrb[0].mxu0
    %333 = vmatprep.mubr.f32.mxu0 0.0
    %334 = vmatmul.mubr.f32.gmra.mrb[0].mxu0 %v256
    %v335 = vpop.f32.mrb[0].mxu0
    %v336 = vadd.f32 %v242, %v335
    %v337 = vpop.f32.mrb[0].mxu0
    %338 = vmatprep.mubr.f32.mxu0 0.0
    %339 = vmatmul.mubr.f32.gmra.mrb[0].mxu0 %v259
    %v340 = vpop.f32.mrb[0].mxu0
    %v341 = vadd.f32 %v246, %v340
    %v342 = vpop.f32.mrb[0].mxu0
    %343 = vmatprep.mubr.f32.mxu0 0.0
    %344 = vmatmul.mubr.f32.gmra.mrb[0].mxu0 %v262
    %v345 = vpop.f32.mrb[0].mxu0
    %v346 = vadd.f32 %v250, %v345
    %v347 = vpop.f32.mrb[0].mxu0
    %348 = vdwg.mxu0
    %v349 = vmax.f32 %v331, 0.0
    %v350 = vmax.f32 %v336, 0.0
    %v351 = vmax.f32 %v341, 0.0
    %v352 = vmax.f32 %v346, 0.0
    %v353 = vld [vmem:[#allocation2 + $0x60] sm:$0xff]
    %355 = vset.pattern.permute.xlu0 32
    %356 = vperm.xlu0 %355, %v353
    %v357 = vpop.permute.xlu0 %356
    %v359 = vsel %vm130, %v353, 0
    %361 = vmatprep.subr.mxu0 0.0
    %362 = vmatpush1.msra.mxu0 %v349
    %363 = vmatprep.subr.mxu0 0.0
    %364 = vmatpush1.msra.mxu0 %v350
    %365 = vmatprep.subr.mxu0 0.0
    %366 = vmatpush1.msra.mxu0 %v351
    %367 = vmatprep.subr.mxu0 0.0
    %368 = vmatpush1.msra.mxu0 %v352
    %369 = vmatprep.subr.mxu0 0.0
    %370 = vmatpush1.msra.mxu0 0.0
    %371 = vmatprep.subr.mxu0 0.0
    %372 = vmatpush1.msra.mxu0 0.0
    %373 = vmatprep.subr.mxu0 0.0
    %374 = vmatpush1.msra.mxu0 0.0
    %375 = vmatprep.subr.mxu0 0.0
    %376 = vmatpush1.msra.mxu0 0.0
    %377 = vmatprep.subr.mxu0 0.0
    %378 = vmatpush1.msra.mxu0 0.0
    %379 = vmatprep.subr.mxu0 0.0
    %380 = vmatpush1.msra.mxu0 0.0
    %381 = vmatprep.subr.mxu0 0.0
    %382 = vmatpush1.msra.mxu0 0.0
    %383 = vmatprep.subr.mxu0 0.0
    %384 = vmatpush1.msra.mxu0 0.0
    %385 = vmatprep.subr.mxu0 0.0
    %386 = vmatpush1.msra.mxu0 0.0
    %387 = vmatprep.subr.mxu0 0.0
    %388 = vmatpush1.msra.mxu0 0.0
    %389 = vmatprep.subr.mxu0 0.0
    %390 = vmatpush1.msra.mxu0 0.0
    %391 = vmatprep.subr.mxu0 0.0
    %392 = vmatpush1.msra.mxu0 0.0
    %393 = vmatprep.subr.mxu0 0.0
    %394 = vmatpush1.msra.mxu0 0.0
    %395 = vmatprep.subr.mxu0 0.0
    %396 = vmatpush1.msra.mxu0 0.0
    %397 = vmatprep.subr.mxu0 0.0
    %398 = vmatpush1.msra.mxu0 0.0
    %399 = vmatprep.subr.mxu0 0.0
    %400 = vmatpush1.msra.mxu0 0.0
    %401 = vmatprep.subr.mxu0 0.0
    %402 = vmatpush1.msra.mxu0 0.0
    %403 = vmatprep.subr.mxu0 0.0
    %404 = vmatpush1.msra.mxu0 0.0
    %405 = vmatprep.subr.mxu0 0.0
    %406 = vmatpush1.msra.mxu0 0.0
    %407 = vmatprep.subr.mxu0 0.0
    %408 = vmatpush1.msra.mxu0 0.0
    %409 = vmatprep.subr.mxu0 0.0
    %410 = vmatpush1.msra.mxu0 0.0
    %411 = vmatprep.subr.mxu0 0.0
    %412 = vmatpush1.msra.mxu0 0.0
    %413 = vmatprep.subr.mxu0 0.0
    %414 = vmatpush1.msra.mxu0 0.0
    %415 = vmatprep.subr.mxu0 0.0
    %416 = vmatpush1.msra.mxu0 0.0
    %417 = vmatprep.subr.mxu0 0.0
    %418 = vmatpush1.msra.mxu0 0.0
    %419 = vmatprep.subr.mxu0 0.0
    %420 = vmatpush1.msra.mxu0 0.0
    %421 = vmatprep.subr.mxu0 0.0
    %422 = vmatpush1.msra.mxu0 0.0
    %423 = vmatprep.subr.mxu0 0.0
    %424 = vmatpush1.msra.mxu0 0.0
    %425 = vmatprep.mubr.f32.mxu0 0.0
    %426 = vmatmul.mubr.f32.gmra.mrb[0].mxu0 %v359
    %v427 = vpop.f32.mrb[0].mxu0
    %v428 = vadd.f32 %v357, %v427
    %v429 = vpop.f32.mrb[0].mxu0
    %430 = vdwg.mxu0
    %431 = vst [vmem:[%s2] sm:$0x7] %v428
    // Predicated region
    $region14: #{mlp_param_model_forward.1} parent=1 // pred_check
      _
    $region15: #{mlp_param_model_forward.1} parent=1 // pred_check_branch
      %433 = sbr.rel (0) target = $region17
    $region16: #{mlp_param_model_forward.1} parent=1 // pred_region
      _
    $region17: #{mlp_param_model_forward.1} parent=1 // pred_fallthru
      _
    // Predicated region
    $region18: #{mlp_param_model_forward.1} parent=1 // pred_check
      _
    $region19: #{mlp_param_model_forward.1} parent=1 // pred_check_branch
      %435 = sbr.rel (0) target = $region21
    $region20: #{mlp_param_model_forward.1} parent=1 // pred_region
      _
    $region21: #{mlp_param_model_forward.1} parent=1 // pred_fallthru
      _
    %436 = vsyncpa [#allocation3], 1

</llo_original>
